<compile_context>
chip_gen: v7x
topology: tpu7x:2x2x1
jax: 0.10.0
libtpu: 0.0.40
codegen_flags: <defaults>
</compile_context>

<pallas_src>
import functools

import jax
import jax.numpy as jnp
from jax.experimental import pallas as pl
from jax.experimental.pallas import tpu as pltpu

NUMS = 4

_VMEM_BUDGET_BYTES = 24 * 1024 * 1024   # double-buffered working-set target
_VMEM_LIMIT_BYTES = 32 * 1024 * 1024    # scoped-VMEM limit handed to Mosaic


def _round_up(x, n):
    return ((x + n - 1) // n) * n


def _round_down(x, n):
    return (x // n) * n


def _sublane_packing(itemsize):
    # Rows per packed vreg sublane group: 8 for 4-byte, 16 for 2-byte, 32 for 1-byte.
    return {4: 8, 2: 16, 1: 32}.get(itemsize, 8)


def _fusion_kernel(w_ref, x_ref, o_ref, *, nums):
    # w_ref: SMEM (nums,) f32; x_ref: VMEM (nums, ...); o_ref: VMEM (...).
    # Single fused expression stored straight into o_ref: Mosaic streams it
    # vreg-by-vreg, so no full-tile accumulator is materialized in VMEM.
    acc = w_ref[0] * x_ref[0].astype(jnp.float32)
    for i in range(1, nums):
        acc = acc + w_ref[i] * x_ref[i].astype(jnp.float32)
    o_ref[...] = acc.astype(o_ref.dtype)


def _pick_tile_m(m, cap, sub):
    """Sublane-tile size: a multiple of `sub` (or the full extent), targeting
    >=4 grid steps (>=2 for smaller tensors) so v7x's 2 TCs are both used and
    the pipeline has work to overlap; capped by the VMEM budget."""
    if m <= 2 * sub:
        return m                       # tiny tensor: single full-extent block
    min_blocks = 4 if m >= 4 * sub else 2
    tile = min(cap, _round_up(pl.cdiv(m, min_blocks), sub))
    return max(sub, tile)


def fusion_layer(x, weights):
    """x: (nums, ...); weights: (nums,).  Returns sum_i weights[i] * x[i]."""
    nums = x.shape[0]
    out_dims = x.shape[1:]
    total = 1
    for d in out_dims:
        total *= d
    itemsize = x.dtype.itemsize
    sub = _sublane_packing(itemsize)
    weights = weights.astype(jnp.float32)   # f32 accumulation everywhere

    kernel = functools.partial(_fusion_kernel, nums=nums)
    w_spec = pl.BlockSpec(memory_space=pltpu.MemorySpace.SMEM)
    cparams = pltpu.CompilerParams(
        dimension_semantics=("parallel",),
        vmem_limit_bytes=_VMEM_LIMIT_BYTES,
    )
    # Working set per grid step: 2 x (nums input tiles + 1 output tile) for
    # double buffering, + 1 tile of slack for temporaries / internal scratch.
    budget_tiles = 2 * (nums + 1) + 1

    if total % 128 == 0:
        # ---- Fast, lane-dense path (free reshape, no padding copy). ----
        for lane in (1024, 512, 256, 128):
            if total % lane == 0:
                break
        m = total // lane
        cap = _VMEM_BUDGET_BYTES // (budget_tiles * lane * itemsize)
        cap = max(sub, _round_down(cap, sub))
        tile_m = _pick_tile_m(m, cap, sub)
        grid = (pl.cdiv(m, tile_m),)
        out = pl.pallas_call(
            kernel,
            out_shape=jax.ShapeDtypeStruct((m, lane), x.dtype),
            grid=grid,
            in_specs=[
                w_spec,                                            # weights -> SMEM
                pl.BlockSpec((nums, tile_m, lane), lambda i: (0, i, 0)),
            ],
            out_specs=pl.BlockSpec((tile_m, lane), lambda i: (i, 0)),
            compiler_params=cparams,
        )(weights, x.reshape(nums, m, lane))
    else:
        # ---- Ragged path (total % 128 != 0): partial final block, no pad. ----
        cap = _VMEM_BUDGET_BYTES // (budget_tiles * itemsize)
        cap = max(1024, _round_down(cap, 1024))
        tile = min(cap, _round_up(pl.cdiv(total, 4), 1024))
        if tile >= total:
            tile = total               # single full-extent block (any size OK)
        grid = (pl.cdiv(total, tile),)
        out = pl.pallas_call(
            kernel,
            out_shape=jax.ShapeDtypeStruct((1, total), x.dtype),
            grid=grid,
            in_specs=[
                w_spec,                                            # weights -> SMEM
                pl.BlockSpec((nums, 1, tile), lambda i: (0, 0, i)),
            ],
            out_specs=pl.BlockSpec((1, tile), lambda i: (0, i)),
            compiler_params=cparams,
        )(weights, x.reshape(nums, 1, total))

    return out.reshape(out_dims)


def _fusion_ref(x, weights):
    # Mirrors the PyTorch forward loop exactly (same summation order).
    out = weights[0] * x[0]
    for i in range(1, x.shape[0]):
        out = out + weights[i] * x[i]
    return out


if __name__ == "__main__":
    key = jax.random.PRNGKey(0)
    k1, k2 = jax.random.split(key)

    # Deterministic parameter init matching _reset_parameters: weights = 1/nums.
    weights = jnp.full((NUMS,), 1.0 / NUMS, dtype=jnp.float32)

    # Lane-aligned path: x = (nums, B, C, H, W) = (4, 2, 4, 16, 16).
    B, C, H, W = 2, 4, 16, 16
    x = jax.random.normal(k1, (NUMS, B, C, H, W), dtype=jnp.float32)
    out = jax.block_until_ready(fusion_layer(x, weights))
    assert out.shape == (B, C, H, W)
    assert jnp.allclose(out, _fusion_ref(x, weights), atol=1e-6, rtol=1e-6)

    # Ragged path (flat size 1215, not a multiple of 128): exercises the
    # in-kernel partial-block masking (2 grid steps, no pad / slice copies).
    x_ragged = jax.random.normal(k2, (NUMS, 5, 3, 9, 9), dtype=jnp.float32)
    out_ragged = jax.block_until_ready(fusion_layer(x_ragged, weights))
    assert out_ragged.shape == (5, 3, 9, 9)
    assert jnp.allclose(out_ragged, _fusion_ref(x_ragged, weights),
                        atol=1e-6, rtol=1e-6)

    print("KERNEL_OK")
</pallas_src>

<mosaic_0001>
module attributes {stable_mosaic.version = 11 : i64} {
  func.func @_fusion_kernel(%arg0: i32, %arg1: memref<4xf32, #tpu.memory_space<smem>>, %arg2: memref<4x2x1024xf32, #tpu.memory_space<vmem>>, %arg3: memref<2x1024xf32, #tpu.memory_space<vmem>>) attributes {dimension_semantics = [#tpu.dimension_semantics<parallel>], iteration_bounds = array<i64: 1>, scalar_prefetch = 0 : i64, scratch_operands = 0 : i64, tpu.core_type = #tpu.core_type<tc>, window_params = [{transform_indices = @transform_0, window_bounds = array<i64: 4>}, {transform_indices = @transform_1, window_bounds = array<i64: 4, 2, 1024>}, {transform_indices = @transform_2, window_bounds = array<i64: 2, 1024>}]} {
    %c0 = arith.constant 0 : index
    %0 = memref.load %arg1[%c0] : memref<4xf32, #tpu.memory_space<smem>>
    %c0_0 = arith.constant 0 : index
    %c0_1 = arith.constant 0 : index
    %c0_2 = arith.constant 0 : index
    %1 = vector.load %arg2[%c0_0, %c0_1, %c0_2] : memref<4x2x1024xf32, #tpu.memory_space<vmem>>, vector<1x2x1024xf32>
    %2 = vector.shape_cast %1 : vector<1x2x1024xf32> to vector<2x1024xf32>
    %3 = vector.broadcast %0 : f32 to vector<2x1024xf32>
    %4 = arith.mulf %3, %2 : vector<2x1024xf32>
    %c1 = arith.constant 1 : index
    %5 = memref.load %arg1[%c1] : memref<4xf32, #tpu.memory_space<smem>>
    %c1_3 = arith.constant 1 : index
    %c0_4 = arith.constant 0 : index
    %c0_5 = arith.constant 0 : index
    %6 = vector.load %arg2[%c1_3, %c0_4, %c0_5] : memref<4x2x1024xf32, #tpu.memory_space<vmem>>, vector<1x2x1024xf32>
    %7 = vector.shape_cast %6 : vector<1x2x1024xf32> to vector<2x1024xf32>
    %8 = vector.broadcast %5 : f32 to vector<2x1024xf32>
    %9 = arith.mulf %8, %7 : vector<2x1024xf32>
    %10 = arith.addf %4, %9 : vector<2x1024xf32>
    %c2 = arith.constant 2 : index
    %11 = memref.load %arg1[%c2] : memref<4xf32, #tpu.memory_space<smem>>
    %c2_6 = arith.constant 2 : index
    %c0_7 = arith.constant 0 : index
    %c0_8 = arith.constant 0 : index
    %12 = vector.load %arg2[%c2_6, %c0_7, %c0_8] : memref<4x2x1024xf32, #tpu.memory_space<vmem>>, vector<1x2x1024xf32>
    %13 = vector.shape_cast %12 : vector<1x2x1024xf32> to vector<2x1024xf32>
    %14 = vector.broadcast %11 : f32 to vector<2x1024xf32>
    %15 = arith.mulf %14, %13 : vector<2x1024xf32>
    %16 = arith.addf %10, %15 : vector<2x1024xf32>
    %c3 = arith.constant 3 : index
    %17 = memref.load %arg1[%c3] : memref<4xf32, #tpu.memory_space<smem>>
    %c3_9 = arith.constant 3 : index
    %c0_10 = arith.constant 0 : index
    %c0_11 = arith.constant 0 : index
    %18 = vector.load %arg2[%c3_9, %c0_10, %c0_11] : memref<4x2x1024xf32, #tpu.memory_space<vmem>>, vector<1x2x1024xf32>
    %19 = vector.shape_cast %18 : vector<1x2x1024xf32> to vector<2x1024xf32>
    %20 = vector.broadcast %17 : f32 to vector<2x1024xf32>
    %21 = arith.mulf %20, %19 : vector<2x1024xf32>
    %22 = arith.addf %16, %21 : vector<2x1024xf32>
    %c0_12 = arith.constant 0 : index
    %c0_13 = arith.constant 0 : index
    %23 = vector.load %arg3[%c0_12, %c0_13] : memref<2x1024xf32, #tpu.memory_space<vmem>>, vector<2x1024xf32>
    tpu.vector_store %arg3[%c0_12, %c0_13], %22 {strides = array<i32>} : memref<2x1024xf32, #tpu.memory_space<vmem>>, vector<2x1024xf32>,
    return
  }
  func.func @transform_0(%arg0: i32) -> i32 {
    %c0_i32 = arith.constant 0 : i32
    %c0_i32_0 = arith.constant 0 : i32
    return %c0_i32 : i32
  }
  func.func @transform_1(%arg0: i32) -> (i32, i32, i32) {
    %c0_i32 = arith.constant 0 : i32
    %c0_i32_0 = arith.constant 0 : i32
    %c0_i32_1 = arith.constant 0 : i32
    return %c0_i32, %arg0, %c0_i32_0 : i32, i32, i32
  }
  func.func @transform_2(%arg0: i32) -> (i32, i32) {
    %c0_i32 = arith.constant 0 : i32
    %c0_i32_0 = arith.constant 0 : i32
    return %arg0, %c0_i32 : i32, i32
  }
}

</mosaic_0001>

<llo_original>
// kernel: tpu_custom_call.1
$region0: #{tpu_custom_call.1}
  #allocation0 [shape = 'u32[]', space=smem, size = 0x4, offset = 0x4, fixed_abs, tag = 'smem constant byte address 0x4 - core index']
  #allocation1 [shape = 'u32[144,128]{1,0:T(1,128)}', space=vmem, size = 0x12000, scoped, tag = 'internal scratch']
  %s0 = inlined_call_operand.hbm [shape: f32[4], index: 0, kind: input, shape index: {}]
  %s1 = inlined_call_operand.hbm [shape: f32[4,2,1024], index: 1, kind: input, shape index: {}]
  %s2 = inlined_call_operand.hbm [shape: f32[2,1024], index: 2, kind: output, shape index: {}]
  %s3 = sld [smem:[#allocation0]]
  $region26: #{tpu_custom_call.1} parent=0
    _
  %s5 = ssub.s32 1, %s3
  %s6 = scalar_select 0, %s5, %s3
  $region1: #{tpu_custom_call.1} parent=0
    #allocation2 [shape = 'u8[512]{0}', space=smem, size = 0x200, scoped, tag = 'input window, operand 0, single buffered']
    #allocation3 [shape = 's32[1]{0}', space=sflag, size = 0x4, scoped, tag = 'scoped memory for tpu_custom_call.1']
    #allocation4 [shape = 's32[1]{0}', space=sflag, size = 0x4, scoped, tag = 'scoped memory for tpu_custom_call.1']
    #allocation5 [shape = 's32[1]{0}', space=sflag, size = 0x4, scoped, tag = 'scoped memory for tpu_custom_call.1']
    #allocation6 [shape = 'u8[32768]{0}', space=vmem, size = 0x8000, scoped, tag = 'input window, operand 1, single buffered']
    #allocation7 [shape = 'u8[8192]{0}', space=vmem, size = 0x2000, scoped, tag = 'output window, operand 0, single buffered']
    %7 = vsyncpa [#allocation5], 0
    %8 = vsyncpa [#allocation3], 0
    %9 = vsyncpa [#allocation4], 0
    // Predicated region
    $region2: #{tpu_custom_call.1} parent=1 // pred_check
      _
    $region3: #{tpu_custom_call.1} parent=1 // pred_check_branch
      %11 = sbr.rel (0) target = $region5
    $region4: #{tpu_custom_call.1} parent=1 // pred_region
      %s13 = ssub.s32 16, 16
      %14 = vsyncadd [#allocation5], %s13
      %17 = dma.hbm_to_smem %s0, 16, [#allocation2], [#allocation5]
    $region5: #{tpu_custom_call.1} parent=1 // pred_fallthru
      _
    // Predicated region
    $region6: #{tpu_custom_call.1} parent=1 // pred_check
      _
    $region7: #{tpu_custom_call.1} parent=1 // pred_check_branch
      %19 = sbr.rel (0) target = $region9
    $region8: #{tpu_custom_call.1} parent=1 // pred_region
      %s21 = ssub.s32 1024, 1024
      %22 = vsyncadd [#allocation3], %s21
      %s23 = sshll.u32 [#allocation6], 4
      %s24 = int_to_ptr.vmem [resolvable:$true] %s23
      %29 = dma.hbm_to_vmem [thread:$0]  %s1, 1024, %s24, [#allocation3], 256, 256, 16
    $region9: #{tpu_custom_call.1} parent=1 // pred_fallthru
      _
    // Predicated region
    $region10: #{tpu_custom_call.1} parent=1 // pred_check
      _
    $region11: #{tpu_custom_call.1} parent=1 // pred_check_branch
      %31 = sbr.rel (0) target = $region13
    $region12: #{tpu_custom_call.1} parent=1 // pred_region
      %32 = dma.done [#allocation5], 16
    $region13: #{tpu_custom_call.1} parent=1 // pred_fallthru
      _
    // Predicated region
    $region14: #{tpu_custom_call.1} parent=1 // pred_check
      _
    $region15: #{tpu_custom_call.1} parent=1 // pred_check_branch
      %34 = sbr.rel (0) target = $region17
    $region16: #{tpu_custom_call.1} parent=1 // pred_region
      %35 = dma.done [#allocation3], 1024
    $region17: #{tpu_custom_call.1} parent=1 // pred_fallthru
      _
    %36 = sfence
    %s37 = sld [smem:[#allocation2]]
    %v38 = vld [vmem:[#allocation6] sm:$0xff]
    %v39 = vld [vmem:[#allocation6 + $0x8] sm:$0xff]
    %v40 = vstv %s37
    %v41 = vmul.f32 %v40, %v38
    %v42 = vmul.f32 %v40, %v39
    %s43 = sld [smem:[#allocation2 + $0x1]]
    %s44 = scalar_lea.vmem [#allocation6], 16
    %v45 = vld [vmem:[%s44] sm:$0xff]
    %v46 = vld [vmem:[%s44 + $0x8] sm:$0xff]
    %v47 = vstv %s43
    %v48 = vmul.f32 %v47, %v45
    %v49 = vmul.f32 %v47, %v46
    %v50 = vadd.f32 %v41, %v48
    %v51 = vadd.f32 %v42, %v49
    %s52 = sld [smem:[#allocation2 + $0x2]]
    %s53 = scalar_lea.vmem [#allocation6], 32
    %v54 = vld [vmem:[%s53] sm:$0xff]
    %v55 = vld [vmem:[%s53 + $0x8] sm:$0xff]
    %v56 = vstv %s52
    %v57 = vmul.f32 %v56, %v54
    %v58 = vmul.f32 %v56, %v55
    %v59 = vadd.f32 %v50, %v57
    %v60 = vadd.f32 %v51, %v58
    %s61 = sld [smem:[#allocation2 + $0x3]]
    %s62 = scalar_lea.vmem [#allocation6], 48
    %v63 = vld [vmem:[%s62] sm:$0xff]
    %v64 = vld [vmem:[%s62 + $0x8] sm:$0xff]
    %v65 = vstv %s61
    %v66 = vmul.f32 %v65, %v63
    %v67 = vmul.f32 %v65, %v64
    %v68 = vadd.f32 %v59, %v66
    %v69 = vadd.f32 %v60, %v67
    %70 = vst [vmem:[#allocation7] sm:$0xff] %v68
    %71 = vst [vmem:[#allocation7 + $0x8] sm:$0xff] %v69
    // Predicated region
    $region18: #{tpu_custom_call.1} parent=1 // pred_check
      _
    $region19: #{tpu_custom_call.1} parent=1 // pred_check_branch
      %73 = sbr.rel (0) target = $region21
    $region20: #{tpu_custom_call.1} parent=1 // pred_region
      %s75 = ssub.s32 256, 256
      %76 = vsyncadd [#allocation4], %s75
      %s78 = sshll.u32 [#allocation7], 4
      %s79 = int_to_ptr.vmem [resolvable:$true] %s78
      %81 = dma.vmem_to_hbm [thread:$0]  %s79, 256, %s2, [#allocation4]
    $region21: #{tpu_custom_call.1} parent=1 // pred_fallthru
      _
    // Predicated region
    $region22: #{tpu_custom_call.1} parent=1 // pred_check
      _
    $region23: #{tpu_custom_call.1} parent=1 // pred_check_branch
      %83 = sbr.rel (0) target = $region25
    $region24: #{tpu_custom_call.1} parent=1 // pred_region
      %84 = dma.done [#allocation4], 256
    $region25: #{tpu_custom_call.1} parent=1 // pred_fallthru
      _
    %85 = vsyncpa [#allocation3], 1
    %86 = vsyncpa [#allocation4], 1
    %87 = vsyncpa [#allocation5], 1

</llo_original>
